<compile_context>
chip_gen: v6e
topology: v6e:2x2x1
jax: 0.10.0
libtpu: 0.0.40
codegen_flags: <defaults>
</compile_context>

<pallas_src>
import jax
import jax.numpy as jnp
from jax import lax
from jax.experimental import pallas as pl
from jax.experimental.pallas import tpu as pltpu

LN_EPS = 1e-5  # PyTorch nn.LayerNorm default

# Row layout of the packed (11, H) vector array:
#   0: b1   1: g1   2: be1
#   3: b2   4: g2   5: be2
#   6: b3   7: g3   8: be3
#   9: wo (as a row)        10: bo (element [0, 0], rest zero-padding)
_NUM_VEC_ROWS = 11


def _ln_relu(h, g, be):
    """LayerNorm over last dim (biased var, eps inside rsqrt) + ReLU."""
    mu = jnp.mean(h, axis=-1, keepdims=True)
    d = h - mu
    var = jnp.mean(d * d, axis=-1, keepdims=True)
    hn = d * lax.rsqrt(var + LN_EPS)
    return jnp.maximum(hn * g + be, 0.0)


def _critic_kernel(s_ref, a_ref, w1s_ref, w1a_ref, w23_ref, vec_ref, out_ref):
    s = s_ref[...]
    a = a_ref[...]
    v = vec_ref[...]  # (11, H) of packed biases / LN params / output head

    # Layer 1 — concat fused: [s, a] @ w1 == s @ w1_s + a @ w1_a
    h = (jnp.dot(s, w1s_ref[...], preferred_element_type=jnp.float32)
         + jnp.dot(a, w1a_ref[...], preferred_element_type=jnp.float32))
    h = _ln_relu(h + v[0:1, :], v[1:2, :], v[2:3, :])

    # Layer 2
    h = jnp.dot(h, w23_ref[0], preferred_element_type=jnp.float32)
    h = _ln_relu(h + v[3:4, :], v[4:5, :], v[5:6, :])

    # Layer 3
    h = jnp.dot(h, w23_ref[1], preferred_element_type=jnp.float32)
    h = _ln_relu(h + v[6:7, :], v[7:8, :], v[8:9, :])

    # Output head: N=1 matmul replaced by a lane reduction (frees MXU/MRF).
    q = jnp.sum(h * v[9:10, :], axis=-1, keepdims=True) + v[10:11, 0:1]
    out_ref[...] = q.astype(out_ref.dtype)


def critic_forward(state, action, packed):
    """state: (B, num_inputs), action: (B, num_actions) -> q: (B, 1)."""
    B, d_s = state.shape
    _, d_a = action.shape
    w1s, w1a, w23, vec = packed["w1s"], packed["w1a"], packed["w23"], packed["vec"]
    H = w1s.shape[1]

    # Batch tiling: one block for small B; 128-row blocks (parallel over
    # TensorCores / pipelined DMA) for training-size batches.
    bm = B if B <= 128 else 128
    grid = (pl.cdiv(B, bm),)

    d_in = d_s + d_a
    flops = 2 * B * (d_in * H + 2 * H * H + H)
    bytes_accessed = 4 * (B * (d_in + 1) + w1s.size + w1a.size + w23.size + vec.size)

    return pl.pallas_call(
        _critic_kernel,
        out_shape=jax.ShapeDtypeStruct((B, 1), jnp.float32),
        grid=grid,
        in_specs=[
            pl.BlockSpec((bm, d_s), lambda i: (i, 0)),        # state rows
            pl.BlockSpec((bm, d_a), lambda i: (i, 0)),        # action rows
            pl.BlockSpec((d_s, H), lambda i: (0, 0)),         # w1_s (grid-invariant)
            pl.BlockSpec((d_a, H), lambda i: (0, 0)),         # w1_a
            pl.BlockSpec((2, H, H), lambda i: (0, 0, 0)),     # stacked w2, w3
            pl.BlockSpec((_NUM_VEC_ROWS, H), lambda i: (0, 0)),  # packed vectors
        ],
        out_specs=pl.BlockSpec((bm, 1), lambda i: (i, 0)),
        compiler_params=pltpu.CompilerParams(
            dimension_semantics=("parallel",)),
        cost_estimate=pl.CostEstimate(
            flops=flops, transcendentals=3 * B, bytes_accessed=bytes_accessed),
    )(state, action, w1s, w1a, w23, vec)


def init_critic_params(key, hidden_size, num_inputs, num_actions):
    """Matches the PyTorch __init__: xavier_uniform_(gain=relu) weights, zero
    biases, LayerNorm gamma=1 / beta=0. Weights stored as (in, out)."""
    gain = jnp.sqrt(2.0)  # nn.init.calculate_gain('relu')

    def xavier(key, fan_in, fan_out):
        bound = gain * jnp.sqrt(6.0 / (fan_in + fan_out))
        return jax.random.uniform(key, (fan_in, fan_out), jnp.float32,
                                  minval=-bound, maxval=bound)

    d_in = num_inputs + num_actions
    k1, k2, k3, k4 = jax.random.split(key, 4)
    H = hidden_size
    params = {
        "w1": xavier(k1, d_in, H), "b1": jnp.zeros((1, H), jnp.float32),
        "g1": jnp.ones((1, H), jnp.float32), "be1": jnp.zeros((1, H), jnp.float32),
        "w2": xavier(k2, H, H), "b2": jnp.zeros((1, H), jnp.float32),
        "g2": jnp.ones((1, H), jnp.float32), "be2": jnp.zeros((1, H), jnp.float32),
        "w3": xavier(k3, H, H), "b3": jnp.zeros((1, H), jnp.float32),
        "g3": jnp.ones((1, H), jnp.float32), "be3": jnp.zeros((1, H), jnp.float32),
        "wo": xavier(k4, H, 1), "bo": jnp.zeros((1, 1), jnp.float32),
    }
    return params


def pack_critic_params(params, num_inputs, hidden_size):
    """One-time repack of the 15 PyTorch-style tensors into 4 kernel inputs."""
    H = hidden_size
    w1s = params["w1"][:num_inputs, :]
    w1a = params["w1"][num_inputs:, :]
    w23 = jnp.stack([params["w2"], params["w3"]], axis=0)          # (2, H, H)
    wo_row = params["wo"].reshape(1, H)                            # (H,1) -> (1,H)
    bo_row = jnp.zeros((1, H), jnp.float32).at[0, 0].set(params["bo"][0, 0])
    vec = jnp.concatenate([
        params["b1"], params["g1"], params["be1"],
        params["b2"], params["g2"], params["be2"],
        params["b3"], params["g3"], params["be3"],
        wo_row, bo_row,
    ], axis=0)                                                     # (11, H)
    return {"w1s": w1s, "w1a": w1a, "w23": w23, "vec": vec}


def _reference_forward(state, action, params):
    """Pure-JAX reference for correctness check."""
    x = jnp.concatenate([state, action], axis=-1)

    def block(h, w, b, g, be):
        h = h @ w + b
        mu = jnp.mean(h, axis=-1, keepdims=True)
        var = jnp.mean((h - mu) ** 2, axis=-1, keepdims=True)
        h = (h - mu) * lax.rsqrt(var + LN_EPS) * g + be
        return jnp.maximum(h, 0.0)

    h = block(x, params["w1"], params["b1"], params["g1"], params["be1"])
    h = block(h, params["w2"], params["b2"], params["g2"], params["be2"])
    h = block(h, params["w3"], params["b3"], params["g3"], params["be3"])
    return h @ params["wo"] + params["bo"]


if __name__ == "__main__":
    # HalfCheetah-v2: obs dim 17, action dim 6; small hidden + batch.
    batch, num_inputs, num_actions, hidden = 8, 17, 6, 32

    key = jax.random.PRNGKey(0)
    k_params, k_state, k_action = jax.random.split(key, 3)

    params = init_critic_params(k_params, hidden, num_inputs, num_actions)
    packed = pack_critic_params(params, num_inputs, hidden)
    state = jax.random.normal(k_state, (batch, num_inputs), jnp.float32)
    action = jax.random.normal(k_action, (batch, num_actions), jnp.float32)

    q = critic_forward(state, action, packed)
    jax.block_until_ready(q)

    q_ref = _reference_forward(state, action, params)
    assert q.shape == (batch, 1)
    assert jnp.allclose(q, q_ref, atol=1e-5, rtol=1e-5), (q, q_ref)

    print("KERNEL_OK")
</pallas_src>

<mosaic_0001>
module attributes {stable_mosaic.version = 11 : i64} {
  func.func @_critic_kernel(%arg0: i32, %arg1: memref<8x17xf32, #tpu.memory_space<vmem>>, %arg2: memref<8x6xf32, #tpu.memory_space<vmem>>, %arg3: memref<17x32xf32, #tpu.memory_space<vmem>>, %arg4: memref<6x32xf32, #tpu.memory_space<vmem>>, %arg5: memref<2x32x32xf32, #tpu.memory_space<vmem>>, %arg6: memref<11x32xf32, #tpu.memory_space<vmem>>, %arg7: memref<8x1xf32, #tpu.memory_space<vmem>>) attributes {dimension_semantics = [#tpu.dimension_semantics<parallel>], iteration_bounds = array<i64: 1>, scalar_prefetch = 0 : i64, scratch_operands = 0 : i64, tpu.core_type = #tpu.core_type<tc>, window_params = [{transform_indices = @transform_0, window_bounds = array<i64: 8, 17>}, {transform_indices = @transform_1, window_bounds = array<i64: 8, 6>}, {pipeline_mode = #tpu.pipeline_mode<synchronous>, transform_indices = @transform_2, window_bounds = array<i64: 17, 32>}, {pipeline_mode = #tpu.pipeline_mode<synchronous>, transform_indices = @transform_3, window_bounds = array<i64: 6, 32>}, {pipeline_mode = #tpu.pipeline_mode<synchronous>, transform_indices = @transform_4, window_bounds = array<i64: 2, 32, 32>}, {pipeline_mode = #tpu.pipeline_mode<synchronous>, transform_indices = @transform_5, window_bounds = array<i64: 11, 32>}, {transform_indices = @transform_6, window_bounds = array<i64: 8, 1>}]} {
    %c0 = arith.constant 0 : index
    %c0_0 = arith.constant 0 : index
    %0 = vector.load %arg1[%c0, %c0_0] : memref<8x17xf32, #tpu.memory_space<vmem>>, vector<8x17xf32>
    %c0_1 = arith.constant 0 : index
    %c0_2 = arith.constant 0 : index
    %1 = vector.load %arg2[%c0_1, %c0_2] : memref<8x6xf32, #tpu.memory_space<vmem>>, vector<8x6xf32>
    %c0_3 = arith.constant 0 : index
    %c0_4 = arith.constant 0 : index
    %2 = vector.load %arg6[%c0_3, %c0_4] : memref<11x32xf32, #tpu.memory_space<vmem>>, vector<11x32xf32>
    %c0_5 = arith.constant 0 : index
    %c0_6 = arith.constant 0 : index
    %3 = vector.load %arg3[%c0_5, %c0_6] : memref<17x32xf32, #tpu.memory_space<vmem>>, vector<17x32xf32>
    %cst = arith.constant dense<0.000000e+00> : vector<8x32xf32>
    %4 = tpu.matmul %0, %3, %cst {dimension_numbers = #tpu.dot_dimension_numbers<[1], [0], [0], [1], [0, 0, 1, 1], [], []>} : vector<8x17xf32>, vector<17x32xf32>, vector<8x32xf32> -> vector<8x32xf32>
    %c0_7 = arith.constant 0 : index
    %c0_8 = arith.constant 0 : index
    %5 = vector.load %arg4[%c0_7, %c0_8] : memref<6x32xf32, #tpu.memory_space<vmem>>, vector<6x32xf32>
    %cst_9 = arith.constant dense<0.000000e+00> : vector<8x32xf32>
    %6 = tpu.matmul %1, %5, %cst_9 {dimension_numbers = #tpu.dot_dimension_numbers<[1], [0], [0], [1], [0, 0, 1, 1], [], []>} : vector<8x6xf32>, vector<6x32xf32>, vector<8x32xf32> -> vector<8x32xf32>
    %7 = arith.addf %4, %6 : vector<8x32xf32>
    %8 = vector.extract_strided_slice %2 {offsets = [0, 0], sizes = [1, 32], strides = [1, 1]} : vector<11x32xf32> to vector<1x32xf32>
    %9 = vector.broadcast %8 : vector<1x32xf32> to vector<8x32xf32>
    %10 = arith.addf %7, %9 : vector<8x32xf32>
    %11 = vector.extract_strided_slice %2 {offsets = [1, 0], sizes = [1, 32], strides = [1, 1]} : vector<11x32xf32> to vector<1x32xf32>
    %12 = vector.extract_strided_slice %2 {offsets = [2, 0], sizes = [1, 32], strides = [1, 1]} : vector<11x32xf32> to vector<1x32xf32>
    %cst_10 = arith.constant dense<0.000000e+00> : vector<8xf32>
    %13 = vector.multi_reduction <add>, %10, %cst_10 [1] : vector<8x32xf32> to vector<8xf32>
    %14 = vector.shape_cast %13 : vector<8xf32> to vector<8x1xf32>
    %cst_11 = arith.constant 3.200000e+01 : f32
    %15 = vector.broadcast %cst_11 : f32 to vector<8x1xf32>
    %16 = arith.divf %14, %15 : vector<8x1xf32>
    %17 = vector.broadcast %16 : vector<8x1xf32> to vector<8x32xf32>
    %18 = arith.subf %10, %17 : vector<8x32xf32>
    %19 = arith.mulf %18, %18 : vector<8x32xf32>
    %cst_12 = arith.constant dense<0.000000e+00> : vector<8xf32>
    %20 = vector.multi_reduction <add>, %19, %cst_12 [1] : vector<8x32xf32> to vector<8xf32>
    %21 = vector.shape_cast %20 : vector<8xf32> to vector<8x1xf32>
    %cst_13 = arith.constant 3.200000e+01 : f32
    %22 = vector.broadcast %cst_13 : f32 to vector<8x1xf32>
    %23 = arith.divf %21, %22 : vector<8x1xf32>
    %cst_14 = arith.constant 9.99999974E-6 : f32
    %24 = vector.broadcast %cst_14 : f32 to vector<8x1xf32>
    %25 = arith.addf %23, %24 : vector<8x1xf32>
    %26 = math.rsqrt %25 : vector<8x1xf32>
    %27 = vector.broadcast %26 : vector<8x1xf32> to vector<8x32xf32>
    %28 = arith.mulf %18, %27 : vector<8x32xf32>
    %29 = vector.broadcast %11 : vector<1x32xf32> to vector<8x32xf32>
    %30 = arith.mulf %28, %29 : vector<8x32xf32>
    %31 = vector.broadcast %12 : vector<1x32xf32> to vector<8x32xf32>
    %32 = arith.addf %30, %31 : vector<8x32xf32>
    %cst_15 = arith.constant 0.000000e+00 : f32
    %33 = vector.broadcast %cst_15 : f32 to vector<8x32xf32>
    %34 = arith.maximumf %32, %33 : vector<8x32xf32>
    %c0_16 = arith.constant 0 : index
    %c0_17 = arith.constant 0 : index
    %c0_18 = arith.constant 0 : index
    %35 = vector.load %arg5[%c0_16, %c0_17, %c0_18] : memref<2x32x32xf32, #tpu.memory_space<vmem>>, vector<1x32x32xf32>
    %36 = vector.shape_cast %35 : vector<1x32x32xf32> to vector<32x32xf32>
    %cst_19 = arith.constant dense<0.000000e+00> : vector<8x32xf32>
    %37 = tpu.matmul %34, %36, %cst_19 {dimension_numbers = #tpu.dot_dimension_numbers<[1], [0], [0], [1], [0, 0, 1, 1], [], []>} : vector<8x32xf32>, vector<32x32xf32>, vector<8x32xf32> -> vector<8x32xf32>
    %38 = vector.extract_strided_slice %2 {offsets = [3, 0], sizes = [1, 32], strides = [1, 1]} : vector<11x32xf32> to vector<1x32xf32>
    %39 = vector.broadcast %38 : vector<1x32xf32> to vector<8x32xf32>
    %40 = arith.addf %37, %39 : vector<8x32xf32>
    %41 = vector.extract_strided_slice %2 {offsets = [4, 0], sizes = [1, 32], strides = [1, 1]} : vector<11x32xf32> to vector<1x32xf32>
    %42 = vector.extract_strided_slice %2 {offsets = [5, 0], sizes = [1, 32], strides = [1, 1]} : vector<11x32xf32> to vector<1x32xf32>
    %cst_20 = arith.constant dense<0.000000e+00> : vector<8xf32>
    %43 = vector.multi_reduction <add>, %40, %cst_20 [1] : vector<8x32xf32> to vector<8xf32>
    %44 = vector.shape_cast %43 : vector<8xf32> to vector<8x1xf32>
    %cst_21 = arith.constant 3.200000e+01 : f32
    %45 = vector.broadcast %cst_21 : f32 to vector<8x1xf32>
    %46 = arith.divf %44, %45 : vector<8x1xf32>
    %47 = vector.broadcast %46 : vector<8x1xf32> to vector<8x32xf32>
    %48 = arith.subf %40, %47 : vector<8x32xf32>
    %49 = arith.mulf %48, %48 : vector<8x32xf32>
    %cst_22 = arith.constant dense<0.000000e+00> : vector<8xf32>
    %50 = vector.multi_reduction <add>, %49, %cst_22 [1] : vector<8x32xf32> to vector<8xf32>
    %51 = vector.shape_cast %50 : vector<8xf32> to vector<8x1xf32>
    %cst_23 = arith.constant 3.200000e+01 : f32
    %52 = vector.broadcast %cst_23 : f32 to vector<8x1xf32>
    %53 = arith.divf %51, %52 : vector<8x1xf32>
    %cst_24 = arith.constant 9.99999974E-6 : f32
    %54 = vector.broadcast %cst_24 : f32 to vector<8x1xf32>
    %55 = arith.addf %53, %54 : vector<8x1xf32>
    %56 = math.rsqrt %55 : vector<8x1xf32>
    %57 = vector.broadcast %56 : vector<8x1xf32> to vector<8x32xf32>
    %58 = arith.mulf %48, %57 : vector<8x32xf32>
    %59 = vector.broadcast %41 : vector<1x32xf32> to vector<8x32xf32>
    %60 = arith.mulf %58, %59 : vector<8x32xf32>
    %61 = vector.broadcast %42 : vector<1x32xf32> to vector<8x32xf32>
    %62 = arith.addf %60, %61 : vector<8x32xf32>
    %cst_25 = arith.constant 0.000000e+00 : f32
    %63 = vector.broadcast %cst_25 : f32 to vector<8x32xf32>
    %64 = arith.maximumf %62, %63 : vector<8x32xf32>
    %c1 = arith.constant 1 : index
    %c0_26 = arith.constant 0 : index
    %c0_27 = arith.constant 0 : index
    %65 = vector.load %arg5[%c1, %c0_26, %c0_27] : memref<2x32x32xf32, #tpu.memory_space<vmem>>, vector<1x32x32xf32>
    %66 = vector.shape_cast %65 : vector<1x32x32xf32> to vector<32x32xf32>
    %cst_28 = arith.constant dense<0.000000e+00> : vector<8x32xf32>
    %67 = tpu.matmul %64, %66, %cst_28 {dimension_numbers = #tpu.dot_dimension_numbers<[1], [0], [0], [1], [0, 0, 1, 1], [], []>} : vector<8x32xf32>, vector<32x32xf32>, vector<8x32xf32> -> vector<8x32xf32>
    %68 = vector.extract_strided_slice %2 {offsets = [6, 0], sizes = [1, 32], strides = [1, 1]} : vector<11x32xf32> to vector<1x32xf32>
    %69 = vector.broadcast %68 : vector<1x32xf32> to vector<8x32xf32>
    %70 = arith.addf %67, %69 : vector<8x32xf32>
    %71 = vector.extract_strided_slice %2 {offsets = [7, 0], sizes = [1, 32], strides = [1, 1]} : vector<11x32xf32> to vector<1x32xf32>
    %72 = vector.extract_strided_slice %2 {offsets = [8, 0], sizes = [1, 32], strides = [1, 1]} : vector<11x32xf32> to vector<1x32xf32>
    %cst_29 = arith.constant dense<0.000000e+00> : vector<8xf32>
    %73 = vector.multi_reduction <add>, %70, %cst_29 [1] : vector<8x32xf32> to vector<8xf32>
    %74 = vector.shape_cast %73 : vector<8xf32> to vector<8x1xf32>
    %cst_30 = arith.constant 3.200000e+01 : f32
    %75 = vector.broadcast %cst_30 : f32 to vector<8x1xf32>
    %76 = arith.divf %74, %75 : vector<8x1xf32>
    %77 = vector.broadcast %76 : vector<8x1xf32> to vector<8x32xf32>
    %78 = arith.subf %70, %77 : vector<8x32xf32>
    %79 = arith.mulf %78, %78 : vector<8x32xf32>
    %cst_31 = arith.constant dense<0.000000e+00> : vector<8xf32>
    %80 = vector.multi_reduction <add>, %79, %cst_31 [1] : vector<8x32xf32> to vector<8xf32>
    %81 = vector.shape_cast %80 : vector<8xf32> to vector<8x1xf32>
    %cst_32 = arith.constant 3.200000e+01 : f32
    %82 = vector.broadcast %cst_32 : f32 to vector<8x1xf32>
    %83 = arith.divf %81, %82 : vector<8x1xf32>
    %cst_33 = arith.constant 9.99999974E-6 : f32
    %84 = vector.broadcast %cst_33 : f32 to vector<8x1xf32>
    %85 = arith.addf %83, %84 : vector<8x1xf32>
    %86 = math.rsqrt %85 : vector<8x1xf32>
    %87 = vector.broadcast %86 : vector<8x1xf32> to vector<8x32xf32>
    %88 = arith.mulf %78, %87 : vector<8x32xf32>
    %89 = vector.broadcast %71 : vector<1x32xf32> to vector<8x32xf32>
    %90 = arith.mulf %88, %89 : vector<8x32xf32>
    %91 = vector.broadcast %72 : vector<1x32xf32> to vector<8x32xf32>
    %92 = arith.addf %90, %91 : vector<8x32xf32>
    %cst_34 = arith.constant 0.000000e+00 : f32
    %93 = vector.broadcast %cst_34 : f32 to vector<8x32xf32>
    %94 = arith.maximumf %92, %93 : vector<8x32xf32>
    %95 = vector.extract_strided_slice %2 {offsets = [9, 0], sizes = [1, 32], strides = [1, 1]} : vector<11x32xf32> to vector<1x32xf32>
    %96 = vector.broadcast %95 : vector<1x32xf32> to vector<8x32xf32>
    %97 = arith.mulf %94, %96 : vector<8x32xf32>
    %cst_35 = arith.constant dense<0.000000e+00> : vector<8xf32>
    %98 = vector.multi_reduction <add>, %97, %cst_35 [1] : vector<8x32xf32> to vector<8xf32>
    %99 = vector.shape_cast %98 : vector<8xf32> to vector<8x1xf32>
    %100 = vector.extract_strided_slice %2 {offsets = [10, 0], sizes = [1, 1], strides = [1, 1]} : vector<11x32xf32> to vector<1x1xf32>
    %101 = vector.broadcast %100 : vector<1x1xf32> to vector<8x1xf32>
    %102 = arith.addf %99, %101 : vector<8x1xf32>
    %c0_36 = arith.constant 0 : index
    %c0_37 = arith.constant 0 : index
    %103 = vector.load %arg7[%c0_36, %c0_37] : memref<8x1xf32, #tpu.memory_space<vmem>>, vector<8x1xf32>
    tpu.vector_store %arg7[%c0_36, %c0_37], %102 {strides = array<i32>} : memref<8x1xf32, #tpu.memory_space<vmem>>, vector<8x1xf32>,
    return
  }
  func.func @transform_0(%arg0: i32) -> (i32, i32) {
    %c0_i32 = arith.constant 0 : i32
    %c0_i32_0 = arith.constant 0 : i32
    return %arg0, %c0_i32 : i32, i32
  }
  func.func @transform_1(%arg0: i32) -> (i32, i32) {
    %c0_i32 = arith.constant 0 : i32
    %c0_i32_0 = arith.constant 0 : i32
    return %arg0, %c0_i32 : i32, i32
  }
  func.func @transform_2(%arg0: i32) -> (i32, i32) {
    %c0_i32 = arith.constant 0 : i32
    %c0_i32_0 = arith.constant 0 : i32
    %c0_i32_1 = arith.constant 0 : i32
    return %c0_i32, %c0_i32_0 : i32, i32
  }
  func.func @transform_3(%arg0: i32) -> (i32, i32) {
    %c0_i32 = arith.constant 0 : i32
    %c0_i32_0 = arith.constant 0 : i32
    %c0_i32_1 = arith.constant 0 : i32
    return %c0_i32, %c0_i32_0 : i32, i32
  }
  func.func @transform_4(%arg0: i32) -> (i32, i32, i32) {
    %c0_i32 = arith.constant 0 : i32
    %c0_i32_0 = arith.constant 0 : i32
    %c0_i32_1 = arith.constant 0 : i32
    %c0_i32_2 = arith.constant 0 : i32
    return %c0_i32, %c0_i32_0, %c0_i32_1 : i32, i32, i32
  }
  func.func @transform_5(%arg0: i32) -> (i32, i32) {
    %c0_i32 = arith.constant 0 : i32
    %c0_i32_0 = arith.constant 0 : i32
    %c0_i32_1 = arith.constant 0 : i32
    return %c0_i32, %c0_i32_0 : i32, i32
  }
  func.func @transform_6(%arg0: i32) -> (i32, i32) {
    %c0_i32 = arith.constant 0 : i32
    %c0_i32_0 = arith.constant 0 : i32
    return %arg0, %c0_i32 : i32, i32
  }
}

</mosaic_0001>

<llo_original>
// kernel: tpu_custom_call.1
$region0: #{tpu_custom_call.1}
  #allocation0 [shape = 'u32[]', space=smem, size = 0x4, offset = 0x4, fixed_abs, tag = 'smem constant byte address 0x4 - core index']
  #allocation1 [shape = 'u32[144,128]{1,0:T(1,128)}', space=vmem, size = 0x12000, scoped, tag = 'internal scratch']
  %s0 = inlined_call_operand.hbm [shape: f32[8,17], index: 0, kind: input, shape index: {}]
  %s1 = inlined_call_operand.hbm [shape: f32[8,6], index: 1, kind: input, shape index: {}]
  %s2 = inlined_call_operand.hbm [shape: f32[17,32], index: 2, kind: input, shape index: {}]
  %s3 = inlined_call_operand.hbm [shape: f32[6,32], index: 3, kind: input, shape index: {}]
  %s4 = inlined_call_operand.hbm [shape: f32[2,32,32], index: 4, kind: input, shape index: {}]
  %s5 = inlined_call_operand.hbm [shape: f32[11,32], index: 5, kind: input, shape index: {}]
  %s6 = inlined_call_operand.vmem [shape: f32[8,1], index: 6, kind: output, shape index: {}]
  %s7 = sld [smem:[#allocation0]]
  $region58: #{tpu_custom_call.1} parent=0
    _
  %s9 = ssub.s32 1, %s7
  %s10 = scalar_select 0, %s9, %s7
  $region1: #{tpu_custom_call.1} parent=0
    #allocation2 [shape = 'u8[4096]{0}', space=vmem, size = 0x1000, scoped, tag = 'input window, operand 0, single buffered']
    #allocation3 [shape = 's32[1]{0}', space=sflag, size = 0x4, scoped, tag = 'scoped memory for tpu_custom_call.1']
    #allocation4 [shape = 'u8[4096]{0}', space=vmem, size = 0x1000, scoped, tag = 'input window, operand 1, single buffered']
    #allocation5 [shape = 's32[1]{0}', space=sflag, size = 0x4, scoped, tag = 'scoped memory for tpu_custom_call.1']
    #allocation6 [shape = 'u8[12288]{0}', space=vmem, size = 0x3000, scoped, tag = 'input window, operand 2, single buffered']
    #allocation7 [shape = 'u8[4096]{0}', space=vmem, size = 0x1000, scoped, tag = 'input window, operand 3, single buffered']
    #allocation8 [shape = 's32[1]{0}', space=sflag, size = 0x4, scoped, tag = 'scoped memory for tpu_custom_call.1']
    #allocation9 [shape = 'u8[32768]{0}', space=vmem, size = 0x8000, scoped, tag = 'input window, operand 4, single buffered']
    #allocation10 [shape = 'u8[8192]{0}', space=vmem, size = 0x2000, scoped, tag = 'input window, operand 5, single buffered']
    #allocation11 [shape = 's32[1]{0}', space=sflag, size = 0x4, scoped, tag = 'scoped memory for tpu_custom_call.1']
    %11 = vsyncpa [#allocation3], 0
    %12 = vsyncpa [#allocation5], 0
    %13 = vsyncpa [#allocation8], 0
    %14 = vsyncpa [#allocation11], 0
    // Predicated region
    $region2: #{tpu_custom_call.1} parent=1 // pred_check
      _
    $region3: #{tpu_custom_call.1} parent=1 // pred_check_branch
      %16 = sbr.rel (0) target = $region5
    $region4: #{tpu_custom_call.1} parent=1 // pred_region
      %s18 = ssub.s32 128, 128
      %19 = vsyncadd [#allocation3], %s18
      %s21 = sshll.u32 [#allocation2], 4
      %s22 = int_to_ptr.vmem [resolvable:$true] %s21
      %24 = dma.hbm_to_vmem [thread:$0]  %s0, 128, %s22, [#allocation3]
    $region5: #{tpu_custom_call.1} parent=1 // pred_fallthru
      _
    // Predicated region
    $region6: #{tpu_custom_call.1} parent=1 // pred_check
      _
    $region7: #{tpu_custom_call.1} parent=1 // pred_check_branch
      %26 = sbr.rel (0) target = $region9
    $region8: #{tpu_custom_call.1} parent=1 // pred_region
      %s28 = ssub.s32 128, 128
      %29 = vsyncadd [#allocation5], %s28
      %s31 = sshll.u32 [#allocation4], 4
      %s32 = int_to_ptr.vmem [resolvable:$true] %s31
      %34 = dma.hbm_to_vmem [thread:$0]  %s1, 128, %s32, [#allocation5]
    $region9: #{tpu_custom_call.1} parent=1 // pred_fallthru
      _
    // Predicated region
    $region10: #{tpu_custom_call.1} parent=1 // pred_check
      _
    $region11: #{tpu_custom_call.1} parent=1 // pred_check_branch
      %36 = sbr.rel (0) target = $region13
    $region12: #{tpu_custom_call.1} parent=1 // pred_region
      %s38 = ssub.s32 384, 384
      %39 = vsyncadd [#allocation5], %s38
      %s40 = sshll.u32 [#allocation6], 4
      %s41 = int_to_ptr.vmem [resolvable:$true] %s40
      %46 = dma.hbm_to_vmem [thread:$0]  %s2, 384, %s41, [#allocation5], 128, 128, 8
    $region13: #{tpu_custom_call.1} parent=1 // pred_fallthru
      _
    // Predicated region
    $region14: #{tpu_custom_call.1} parent=1 // pred_check
      _
    $region15: #{tpu_custom_call.1} parent=1 // pred_check_branch
      %48 = sbr.rel (0) target = $region17
    $region16: #{tpu_custom_call.1} parent=1 // pred_region
      %s50 = ssub.s32 128, 128
      %51 = vsyncadd [#allocation8], %s50
      %s53 = sshll.u32 [#allocation7], 4
      %s54 = int_to_ptr.vmem [resolvable:$true] %s53
      %56 = dma.hbm_to_vmem [thread:$0]  %s3, 128, %s54, [#allocation8]
    $region17: #{tpu_custom_call.1} parent=1 // pred_fallthru
      _
    // Predicated region
    $region18: #{tpu_custom_call.1} parent=1 // pred_check
      _
    $region19: #{tpu_custom_call.1} parent=1 // pred_check_branch
      %58 = sbr.rel (0) target = $region21
    $region20: #{tpu_custom_call.1} parent=1 // pred_region
      %s60 = ssub.s32 1024, 1024
      %61 = vsyncadd [#allocation8], %s60
      %s62 = sshll.u32 [#allocation9], 4
      %s63 = int_to_ptr.vmem [resolvable:$true] %s62
      %68 = dma.hbm_to_vmem [thread:$0]  %s4, 1024, %s63, [#allocation8], 128, 128, 8
    $region21: #{tpu_custom_call.1} parent=1 // pred_fallthru
      _
    // Predicated region
    $region22: #{tpu_custom_call.1} parent=1 // pred_check
      _
    $region23: #{tpu_custom_call.1} parent=1 // pred_check_branch
      %70 = sbr.rel (0) target = $region25
    $region24: #{tpu_custom_call.1} parent=1 // pred_region
      %s72 = ssub.s32 256, 256
      %73 = vsyncadd [#allocation11], %s72
      %s74 = sshll.u32 [#allocation10], 4
      %s75 = int_to_ptr.vmem [resolvable:$true] %s74
      %80 = dma.hbm_to_vmem [thread:$0]  %s5, 256, %s75, [#allocation11], 128, 128, 8
    $region25: #{tpu_custom_call.1} parent=1 // pred_fallthru
      _
    // Predicated region
    $region26: #{tpu_custom_call.1} parent=1 // pred_check
      _
    $region27: #{tpu_custom_call.1} parent=1 // pred_check_branch
      %82 = sbr.rel (0) target = $region29
    $region28: #{tpu_custom_call.1} parent=1 // pred_region
      %83 = dma.done [#allocation3], 128
    $region29: #{tpu_custom_call.1} parent=1 // pred_fallthru
      _
    // Predicated region
    $region30: #{tpu_custom_call.1} parent=1 // pred_check
      _
    $region31: #{tpu_custom_call.1} parent=1 // pred_check_branch
      %85 = sbr.rel (0) target = $region33
    $region32: #{tpu_custom_call.1} parent=1 // pred_region
      %86 = dma.done [#allocation5], 128
    $region33: #{tpu_custom_call.1} parent=1 // pred_fallthru
      _
    // Predicated region
    $region34: #{tpu_custom_call.1} parent=1 // pred_check
      _
    $region35: #{tpu_custom_call.1} parent=1 // pred_check_branch
      %88 = sbr.rel (0) target = $region37
    $region36: #{tpu_custom_call.1} parent=1 // pred_region
      %89 = dma.done [#allocation5], 384
    $region37: #{tpu_custom_call.1} parent=1 // pred_fallthru
      _
    // Predicated region
    $region38: #{tpu_custom_call.1} parent=1 // pred_check
      _
    $region39: #{tpu_custom_call.1} parent=1 // pred_check_branch
      %91 = sbr.rel (0) target = $region41
    $region40: #{tpu_custom_call.1} parent=1 // pred_region
      %92 = dma.done [#allocation8], 128
    $region41: #{tpu_custom_call.1} parent=1 // pred_fallthru
      _
    // Predicated region
    $region42: #{tpu_custom_call.1} parent=1 // pred_check
      _
    $region43: #{tpu_custom_call.1} parent=1 // pred_check_branch
      %94 = sbr.rel (0) target = $region45
    $region44: #{tpu_custom_call.1} parent=1 // pred_region
      %95 = dma.done [#allocation8], 1024
    $region45: #{tpu_custom_call.1} parent=1 // pred_fallthru
      _
    // Predicated region
    $region46: #{tpu_custom_call.1} parent=1 // pred_check
      _
    $region47: #{tpu_custom_call.1} parent=1 // pred_check_branch
      %97 = sbr.rel (0) target = $region49
    $region48: #{tpu_custom_call.1} parent=1 // pred_region
      %98 = dma.done [#allocation11], 256
    $region49: #{tpu_custom_call.1} parent=1 // pred_fallthru
      _
    %v99 = vld [vmem:[#allocation2] sm:$0xff]
    %v100 = vld [vmem:[#allocation4] sm:$0xff]
    %v101 = vld [vmem:[#allocation10] sm:$0xff]
    %v102 = vld [vmem:[#allocation10 + $0x8] sm:$0x7]
    %v103 = vld [vmem:[#allocation6] sm:$0xff]
    %v104 = vld [vmem:[#allocation6 + $0x8] sm:$0xff]
    %v105 = vld [vmem:[#allocation6 + $0x10] sm:$0x1]
    %v106 = vld [vmem:[#allocation7] sm:$0x3f]
    %vm107 = vcmask 48128
    %v109 = vsel %vm107, %v100, 0
    %vm111 = vcmask 1045504
    %v113 = vsel %vm111, %v106, 0
    %115 = vmatprep.subr.mxu0 0.0
    %116 = vmatpush1.msra.mxu0 0.0
    %117 = vmatprep.subr.mxu0 0.0
    %118 = vmatpush1.msra.mxu0 0.0
    %119 = vmatprep.subr.mxu0 0.0
    %120 = vmatpush1.msra.mxu0 0.0
    %121 = vmatprep.subr.mxu0 0.0
    %122 = vmatpush1.msra.mxu0 0.0
    %123 = vmatprep.subr.mxu0 0.0
    %124 = vmatpush1.msra.mxu0 0.0
    %125 = vmatprep.subr.mxu0 0.0
    %126 = vmatpush1.msra.mxu0 0.0
    %127 = vmatprep.subr.mxu0 0.0
    %128 = vmatpush1.msra.mxu0 0.0
    %129 = vmatprep.subr.mxu0 0.0
    %130 = vmatpush1.msra.mxu0 0.0
    %131 = vmatprep.subr.mxu0 0.0
    %132 = vmatpush1.msra.mxu0 0.0
    %133 = vmatprep.subr.mxu0 0.0
    %134 = vmatpush1.msra.mxu0 0.0
    %135 = vmatprep.subr.mxu0 0.0
    %136 = vmatpush1.msra.mxu0 0.0
    %137 = vmatprep.subr.mxu0 0.0
    %138 = vmatpush1.msra.mxu0 0.0
    %139 = vmatprep.subr.mxu0 0.0
    %140 = vmatpush1.msra.mxu0 0.0
    %141 = vmatprep.subr.mxu0 0.0
    %142 = vmatpush1.msra.mxu0 0.0
    %143 = vmatprep.subr.mxu0 0.0
    %144 = vmatpush1.msra.mxu0 0.0
    %145 = vmatprep.subr.mxu0 0.0
    %146 = vmatpush1.msra.mxu0 %v113
    %147 = vmatprep.subr.mxu0 0.0
    %148 = vmatpush2.msra.mxu0 0.0
    %149 = vmatprep.subr.mxu0 0.0
    %150 = vmatpush2.msra.mxu0 0.0
    %151 = vmatprep.subr.mxu0 0.0
    %152 = vmatpush2.msra.mxu0 0.0
    %153 = vmatprep.subr.mxu0 0.0
    %154 = vmatpush2.msra.mxu0 0.0
    %155 = vmatprep.subr.mxu0 0.0
    %156 = vmatpush2.msra.mxu0 0.0
    %157 = vmatprep.subr.mxu0 0.0
    %158 = vmatpush2.msra.mxu0 0.0
    %159 = vmatprep.subr.mxu0 0.0
    %160 = vmatpush2.msra.mxu0 0.0
    %161 = vmatprep.subr.mxu0 0.0
    %162 = vmatpush2.msra.mxu0 0.0
    %163 = vmatprep.subr.mxu0 0.0
    %164 = vmatpush2.msra.mxu0 0.0
    %165 = vmatprep.subr.mxu0 0.0
    %166 = vmatpush2.msra.mxu0 0.0
    %167 = vmatprep.subr.mxu0 0.0
    %168 = vmatpush2.msra.mxu0 0.0
    %169 = vmatprep.subr.mxu0 0.0
    %170 = vmatpush2.msra.mxu0 0.0
    %171 = vmatprep.subr.mxu0 0.0
    %172 = vmatpush2.msra.mxu0 0.0
    %173 = vmatprep.subr.mxu0 0.0
    %174 = vmatpush2.msra.mxu0 0.0
    %175 = vmatprep.subr.mxu0 0.0
    %176 = vmatpush2.msra.mxu0 0.0
    %177 = vmatprep.subr.mxu0 0.0
    %178 = vmatpush2.msra.mxu0 0.0
    %179 = vmatprep.mubr.f32.mxu0 0.0
    %180 = vmatmul.mubr.f32.gmra.mxu0 %v109
    %v181 = vpop.f32.mrf.mxu0
    %v182 = vadd.f32 0.0, %v181
    %v183 = vpop.f32.mrf.mxu0
    %184 = vdwg.mxu0
    %vm185 = vcmask 138240
    %v187 = vsel %vm185, %v99, 0
    %vm189 = vcmask 1040384
    %v191 = vsel %vm189, %v105, 0
    %193 = vmatprep.subr.mxu0 0.0
    %194 = vmatpush1.msra.mxu0 0.0
    %195 = vmatprep.subr.mxu0 0.0
    %196 = vmatpush1.msra.mxu0 0.0
    %197 = vmatprep.subr.mxu0 0.0
    %198 = vmatpush1.msra.mxu0 0.0
    %199 = vmatprep.subr.mxu0 0.0
    %200 = vmatpush1.msra.mxu0 0.0
    %201 = vmatprep.subr.mxu0 0.0
    %202 = vmatpush1.msra.mxu0 0.0
    %203 = vmatprep.subr.mxu0 0.0
    %204 = vmatpush1.msra.mxu0 0.0
    %205 = vmatprep.subr.mxu0 0.0
    %206 = vmatpush1.msra.mxu0 0.0
    %207 = vmatprep.subr.mxu0 0.0
    %208 = vmatpush1.msra.mxu0 0.0
    %209 = vmatprep.subr.mxu0 0.0
    %210 = vmatpush1.msra.mxu0 0.0
    %211 = vmatprep.subr.mxu0 0.0
    %212 = vmatpush1.msra.mxu0 0.0
    %213 = vmatprep.subr.mxu0 0.0
    %214 = vmatpush1.msra.mxu0 0.0
    %215 = vmatprep.subr.mxu0 0.0
    %216 = vmatpush1.msra.mxu0 0.0
    %217 = vmatprep.subr.mxu0 0.0
    %218 = vmatpush1.msra.mxu0 0.0
    %219 = vmatprep.subr.mxu0 0.0
    %220 = vmatpush1.msra.mxu0 %v191
    %221 = vmatprep.subr.mxu0 0.0
    %222 = vmatpush1.msra.mxu0 %v104
    %223 = vmatprep.subr.mxu0 0.0
    %224 = vmatpush1.msra.mxu0 %v103
    %225 = vmatprep.subr.mxu0 0.0
    %226 = vmatpush2.msra.mxu0 0.0
    %227 = vmatprep.subr.mxu0 0.0
    %228 = vmatpush2.msra.mxu0 0.0
    %229 = vmatprep.subr.mxu0 0.0
    %230 = vmatpush2.msra.mxu0 0.0
    %231 = vmatprep.subr.mxu0 0.0
    %232 = vmatpush2.msra.mxu0 0.0
    %233 = vmatprep.subr.mxu0 0.0
    %234 = vmatpush2.msra.mxu0 0.0
    %235 = vmatprep.subr.mxu0 0.0
    %236 = vmatpush2.msra.mxu0 0.0
    %237 = vmatprep.subr.mxu0 0.0
    %238 = vmatpush2.msra.mxu0 0.0
    %239 = vmatprep.subr.mxu0 0.0
    %240 = vmatpush2.msra.mxu0 0.0
    %241 = vmatprep.subr.mxu0 0.0
    %242 = vmatpush2.msra.mxu0 0.0
    %243 = vmatprep.subr.mxu0 0.0
    %244 = vmatpush2.msra.mxu0 0.0
    %245 = vmatprep.subr.mxu0 0.0
    %246 = vmatpush2.msra.mxu0 0.0
    %247 = vmatprep.subr.mxu0 0.0
    %248 = vmatpush2.msra.mxu0 0.0
    %249 = vmatprep.subr.mxu0 0.0
    %250 = vmatpush2.msra.mxu0 0.0
    %251 = vmatprep.subr.mxu0 0.0
    %252 = vmatpush2.msra.mxu0 0.0
    %253 = vmatprep.subr.mxu0 0.0
    %254 = vmatpush2.msra.mxu0 0.0
    %255 = vmatprep.subr.mxu0 0.0
    %256 = vmatpush2.msra.mxu0 0.0
    %257 = vmatprep.mubr.f32.mxu0 0.0
    %258 = vmatmul.mubr.f32.gmra.mxu0 %v187
    %v259 = vpop.f32.mrf.mxu0
    %v260 = vadd.f32 %v182, %v259
    %v261 = vpop.f32.mrf.mxu0
    %262 = vdwg.mxu0
    %v263 = vlaneseq
    %v264 = vshrl.u32 %v263, 7
    %v265 = vsub.s32 0, %v264
    %v266 = vrot.slane %v101, %v265
    %v267 = vadd.f32 %v260, %v266
    %vm268 = vcmask 261120
    %v269 = vsel %vm268, %v267, 0.0
    %270 = vadd.xlane.f32.xlu0 %v269
    %v271 = vpop.xlane.xlu0 %270
    %v272 = vrcp.pop 32.0
    %v273 = vmul.f32 %v271, %v272
    %v274 = vsub.f32 %v267, %v273
    %v275 = vmul.f32 %v274, %v274
    %v276 = vsel %vm268, %v275, 0.0
    %277 = vadd.xlane.f32.xlu0 %v276
    %v278 = vpop.xlane.xlu0 %277
    %v279 = vmul.f32 %v278, %v272
    %v280 = vadd.f32 %v279, 1e-05
    %v281 = vrsqrt.pop %v280
    %v282 = vmul.f32 %v274, %v281
    %v283 = vlaneseq
    %v284 = vshrl.u32 %v283, 7
    %v285 = vsub.s32 1, %v284
    %v286 = vrot.slane %v101, %v285
    %v287 = vmul.f32 %v282, %v286
    %v288 = vlaneseq
    %v289 = vshrl.u32 %v288, 7
    %v290 = vsub.s32 2, %v289
    %v291 = vrot.slane %v101, %v290
    %v292 = vadd.f32 %v287, %v291
    %v293 = vmax.f32 %v292, 0.0
    %v294 = vld [vmem:[#allocation9] sm:$0xff]
    %v295 = vld [vmem:[#allocation9 + $0x8] sm:$0xff]
    %v296 = vld [vmem:[#allocation9 + $0x10] sm:$0xff]
    %v297 = vld [vmem:[#allocation9 + $0x18] sm:$0xff]
    %v298 = vlaneseq
    %v299 = vshrl.u32 %v298, 7
    %v300 = vsub.s32 3, %v299
    %v301 = vrot.slane %v101, %v300
    %v303 = vsel %vm268, %v293, 0
    %305 = vmatprep.subr.mxu0 0.0
    %306 = vmatpush1.msra.mxu0 0.0
    %307 = vmatprep.subr.mxu0 0.0
    %308 = vmatpush1.msra.mxu0 0.0
    %309 = vmatprep.subr.mxu0 0.0
    %310 = vmatpush1.msra.mxu0 0.0
    %311 = vmatprep.subr.mxu0 0.0
    %312 = vmatpush1.msra.mxu0 0.0
    %313 = vmatprep.subr.mxu0 0.0
    %314 = vmatpush1.msra.mxu0 0.0
    %315 = vmatprep.subr.mxu0 0.0
    %316 = vmatpush1.msra.mxu0 0.0
    %317 = vmatprep.subr.mxu0 0.0
    %318 = vmatpush1.msra.mxu0 0.0
    %319 = vmatprep.subr.mxu0 0.0
    %320 = vmatpush1.msra.mxu0 0.0
    %321 = vmatprep.subr.mxu0 0.0
    %322 = vmatpush1.msra.mxu0 0.0
    %323 = vmatprep.subr.mxu0 0.0
    %324 = vmatpush1.msra.mxu0 0.0
    %325 = vmatprep.subr.mxu0 0.0
    %326 = vmatpush1.msra.mxu0 0.0
    %327 = vmatprep.subr.mxu0 0.0
    %328 = vmatpush1.msra.mxu0 0.0
    %329 = vmatprep.subr.mxu0 0.0
    %330 = vmatpush1.msra.mxu0 %v297
    %331 = vmatprep.subr.mxu0 0.0
    %332 = vmatpush1.msra.mxu0 %v296
    %333 = vmatprep.subr.mxu0 0.0
    %334 = vmatpush1.msra.mxu0 %v295
    %335 = vmatprep.subr.mxu0 0.0
    %336 = vmatpush1.msra.mxu0 %v294
    %337 = vmatprep.subr.mxu0 0.0
    %338 = vmatpush2.msra.mxu0 0.0
    %339 = vmatprep.subr.mxu0 0.0
    %340 = vmatpush2.msra.mxu0 0.0
    %341 = vmatprep.subr.mxu0 0.0
    %342 = vmatpush2.msra.mxu0 0.0
    %343 = vmatprep.subr.mxu0 0.0
    %344 = vmatpush2.msra.mxu0 0.0
    %345 = vmatprep.subr.mxu0 0.0
    %346 = vmatpush2.msra.mxu0 0.0
    %347 = vmatprep.subr.mxu0 0.0
    %348 = vmatpush2.msra.mxu0 0.0
    %349 = vmatprep.subr.mxu0 0.0
    %350 = vmatpush2.msra.mxu0 0.0
    %351 = vmatprep.subr.mxu0 0.0
    %352 = vmatpush2.msra.mxu0 0.0
    %353 = vmatprep.subr.mxu0 0.0
    %354 = vmatpush2.msra.mxu0 0.0
    %355 = vmatprep.subr.mxu0 0.0
    %356 = vmatpush2.msra.mxu0 0.0
    %357 = vmatprep.subr.mxu0 0.0
    %358 = vmatpush2.msra.mxu0 0.0
    %359 = vmatprep.subr.mxu0 0.0
    %360 = vmatpush2.msra.mxu0 0.0
    %361 = vmatprep.subr.mxu0 0.0
    %362 = vmatpush2.msra.mxu0 0.0
    %363 = vmatprep.subr.mxu0 0.0
    %364 = vmatpush2.msra.mxu0 0.0
    %365 = vmatprep.subr.mxu0 0.0
    %366 = vmatpush2.msra.mxu0 0.0
    %367 = vmatprep.subr.mxu0 0.0
    %368 = vmatpush2.msra.mxu0 0.0
    %369 = vmatprep.mubr.f32.mxu0 0.0
    %370 = vmatmul.mubr.f32.gmra.mxu0 %v303
    %v371 = vpop.f32.mrf.mxu0
    %v372 = vadd.f32 %v301, %v371
    %v373 = vpop.f32.mrf.mxu0
    %374 = vdwg.mxu0
    %v375 = vsel %vm268, %v372, 0.0
    %376 = vadd.xlane.f32.xlu0 %v375
    %v377 = vpop.xlane.xlu0 %376
    %v378 = vmul.f32 %v377, %v272
    %v379 = vsub.f32 %v372, %v378
    %v380 = vmul.f32 %v379, %v379
    %v381 = vsel %vm268, %v380, 0.0
    %382 = vadd.xlane.f32.xlu0 %v381
    %v383 = vpop.xlane.xlu0 %382
    %v384 = vmul.f32 %v383, %v272
    %v385 = vadd.f32 %v384, 1e-05
    %v386 = vrsqrt.pop %v385
    %v387 = vmul.f32 %v379, %v386
    %v388 = vlaneseq
    %v389 = vshrl.u32 %v388, 7
    %v390 = vsub.s32 4, %v389
    %v391 = vrot.slane %v101, %v390
    %v392 = vmul.f32 %v387, %v391
    %v393 = vlaneseq
    %v394 = vshrl.u32 %v393, 7
    %v395 = vsub.s32 5, %v394
    %v396 = vrot.slane %v101, %v395
    %v397 = vadd.f32 %v392, %v396
    %v398 = vmax.f32 %v397, 0.0
    %s399 = scalar_lea.vmem [#allocation9], 32
    %v400 = vld [vmem:[%s399] sm:$0xff]
    %v401 = vld [vmem:[%s399 + $0x8] sm:$0xff]
    %v402 = vld [vmem:[%s399 + $0x10] sm:$0xff]
    %v403 = vld [vmem:[%s399 + $0x18] sm:$0xff]
    %v404 = vlaneseq
    %v405 = vshrl.u32 %v404, 7
    %v406 = vsub.s32 6, %v405
    %v407 = vrot.slane %v101, %v406
    %v409 = vsel %vm268, %v398, 0
    %411 = vmatprep.subr.mxu0 0.0
    %412 = vmatpush1.msra.mxu0 0.0
    %413 = vmatprep.subr.mxu0 0.0
    %414 = vmatpush1.msra.mxu0 0.0
    %415 = vmatprep.subr.mxu0 0.0
    %416 = vmatpush1.msra.mxu0 0.0
    %417 = vmatprep.subr.mxu0 0.0
    %418 = vmatpush1.msra.mxu0 0.0
    %419 = vmatprep.subr.mxu0 0.0
    %420 = vmatpush1.msra.mxu0 0.0
    %421 = vmatprep.subr.mxu0 0.0
    %422 = vmatpush1.msra.mxu0 0.0
    %423 = vmatprep.subr.mxu0 0.0
    %424 = vmatpush1.msra.mxu0 0.0
    %425 = vmatprep.subr.mxu0 0.0
    %426 = vmatpush1.msra.mxu0 0.0
    %427 = vmatprep.subr.mxu0 0.0
    %428 = vmatpush1.msra.mxu0 0.0
    %429 = vmatprep.subr.mxu0 0.0
    %430 = vmatpush1.msra.mxu0 0.0
    %431 = vmatprep.subr.mxu0 0.0
    %432 = vmatpush1.msra.mxu0 0.0
    %433 = vmatprep.subr.mxu0 0.0
    %434 = vmatpush1.msra.mxu0 0.0
    %435 = vmatprep.subr.mxu0 0.0
    %436 = vmatpush1.msra.mxu0 %v403
    %437 = vmatprep.subr.mxu0 0.0
    %438 = vmatpush1.msra.mxu0 %v402
    %439 = vmatprep.subr.mxu0 0.0
    %440 = vmatpush1.msra.mxu0 %v401
    %441 = vmatprep.subr.mxu0 0.0
    %442 = vmatpush1.msra.mxu0 %v400
    %443 = vmatprep.subr.mxu0 0.0
    %444 = vmatpush2.msra.mxu0 0.0
    %445 = vmatprep.subr.mxu0 0.0
    %446 = vmatpush2.msra.mxu0 0.0
    %447 = vmatprep.subr.mxu0 0.0
    %448 = vmatpush2.msra.mxu0 0.0
    %449 = vmatprep.subr.mxu0 0.0
    %450 = vmatpush2.msra.mxu0 0.0
    %451 = vmatprep.subr.mxu0 0.0
    %452 = vmatpush2.msra.mxu0 0.0
    %453 = vmatprep.subr.mxu0 0.0
    %454 = vmatpush2.msra.mxu0 0.0
    %455 = vmatprep.subr.mxu0 0.0
    %456 = vmatpush2.msra.mxu0 0.0
    %457 = vmatprep.subr.mxu0 0.0
    %458 = vmatpush2.msra.mxu0 0.0
    %459 = vmatprep.subr.mxu0 0.0
    %460 = vmatpush2.msra.mxu0 0.0
    %461 = vmatprep.subr.mxu0 0.0
    %462 = vmatpush2.msra.mxu0 0.0
    %463 = vmatprep.subr.mxu0 0.0
    %464 = vmatpush2.msra.mxu0 0.0
    %465 = vmatprep.subr.mxu0 0.0
    %466 = vmatpush2.msra.mxu0 0.0
    %467 = vmatprep.subr.mxu0 0.0
    %468 = vmatpush2.msra.mxu0 0.0
    %469 = vmatprep.subr.mxu0 0.0
    %470 = vmatpush2.msra.mxu0 0.0
    %471 = vmatprep.subr.mxu0 0.0
    %472 = vmatpush2.msra.mxu0 0.0
    %473 = vmatprep.subr.mxu0 0.0
    %474 = vmatpush2.msra.mxu0 0.0
    %475 = vmatprep.mubr.f32.mxu0 0.0
    %476 = vmatmul.mubr.f32.gmra.mxu0 %v409
    %v477 = vpop.f32.mrf.mxu0
    %v478 = vadd.f32 %v407, %v477
    %v479 = vpop.f32.mrf.mxu0
    %480 = vdwg.mxu0
    %v481 = vsel %vm268, %v478, 0.0
    %482 = vadd.xlane.f32.xlu0 %v481
    %v483 = vpop.xlane.xlu0 %482
    %v484 = vmul.f32 %v483, %v272
    %v485 = vsub.f32 %v478, %v484
    %v486 = vmul.f32 %v485, %v485
    %v487 = vsel %vm268, %v486, 0.0
    %488 = vadd.xlane.f32.xlu0 %v487
    %v489 = vpop.xlane.xlu0 %488
    %v490 = vmul.f32 %v489, %v272
    %v491 = vadd.f32 %v490, 1e-05
    %v492 = vrsqrt.pop %v491
    %v493 = vmul.f32 %v485, %v492
    %v494 = vlaneseq
    %v495 = vshrl.u32 %v494, 7
    %v496 = vsub.s32 7, %v495
    %v497 = vrot.slane %v101, %v496
    %v498 = vmul.f32 %v493, %v497
    %v499 = vlaneseq
    %v500 = vshrl.u32 %v499, 7
    %v501 = vsub.s32 0, %v500
    %v502 = vrot.slane %v102, %v501
    %v503 = vadd.f32 %v498, %v502
    %v504 = vmax.f32 %v503, 0.0
    %v505 = vlaneseq
    %v506 = vshrl.u32 %v505, 7
    %v507 = vsub.s32 1, %v506
    %v508 = vrot.slane %v102, %v507
    %v509 = vmul.f32 %v504, %v508
    %v510 = vsel %vm268, %v509, 0.0
    %511 = vadd.xlane.f32.xlu0 %v510
    %v512 = vpop.xlane.xlu0 %511
    %v513 = vlaneseq
    %v514 = vshrl.u32 %v513, 7
    %v515 = vsub.s32 2, %v514
    %v516 = vrot.slane %v102, %v515
    %v517 = vadd.f32 %v512, %v516
    %vm518 = vcmask 7168
    %519 = vst.msk [vmem:[%s6] sm:$0xff] %vm518, %v517
    // Predicated region
    $region50: #{tpu_custom_call.1} parent=1 // pred_check
      _
    $region51: #{tpu_custom_call.1} parent=1 // pred_check_branch
      %521 = sbr.rel (0) target = $region53
    $region52: #{tpu_custom_call.1} parent=1 // pred_region
      _
    $region53: #{tpu_custom_call.1} parent=1 // pred_fallthru
      _
    // Predicated region
    $region54: #{tpu_custom_call.1} parent=1 // pred_check
      _
    $region55: #{tpu_custom_call.1} parent=1 // pred_check_branch
      %523 = sbr.rel (0) target = $region57
    $region56: #{tpu_custom_call.1} parent=1 // pred_region
      _
    $region57: #{tpu_custom_call.1} parent=1 // pred_fallthru
      _
    %524 = vsyncpa [#allocation3], 1
    %525 = vsyncpa [#allocation5], 1
    %526 = vsyncpa [#allocation8], 1
    %527 = vsyncpa [#allocation11], 1

</llo_original>
